<compile_context>
chip_gen: v7x
topology: tpu7x:2x2x1
jax: 0.10.0
libtpu: 0.0.40
codegen_flags: <defaults>
</compile_context>

<pallas_src>
import functools

import jax
import jax.numpy as jnp
from jax import lax
from jax.experimental import pallas as pl
from jax.experimental.pallas import tpu as pltpu


# ----------------------------------------------------------------------------
# Fused kernel: QKV projection + per-head attention + output projection
# ----------------------------------------------------------------------------
def _mhsa_fused_kernel(x_ref, wqkv_ref, bqkv_ref, wo_ref, bo_ref, o_ref,
                       *, num_heads, dim_head):
    x = x_ref[0]                                                   # (L, C)
    C = num_heads * dim_head

    # Single lane-dense QKV projection: (L, C) @ (C, 3C) -> (L, 3C)
    # (1/sqrt(dh) already folded into the Q slice of wqkv/bqkv.)
    qkv = jnp.dot(x, wqkv_ref[...], preferred_element_type=jnp.float32)
    qkv = qkv + bqkv_ref[...]                                      # (L, 3C)

    head_outs = []
    for h in range(num_heads):                                     # static unroll
        lo = h * dim_head
        q = qkv[:, lo:lo + dim_head]                               # (L, dh), pre-scaled
        k = qkv[:, C + lo:C + lo + dim_head]                       # (L, dh)
        v = qkv[:, 2 * C + lo:2 * C + lo + dim_head]               # (L, dh)

        # q @ k^T without materializing k.T (contract last axis of both).
        s = lax.dot_general(q, k, (((1,), (1,)), ((), ())),
                            preferred_element_type=jnp.float32)    # (L, L)
        s = s - jnp.max(s, axis=-1, keepdims=True)                 # stability (XLU)
        p = jnp.exp(s)                                             # EUP
        row_sum = jnp.sum(p, axis=-1, keepdims=True)               # (L, 1)

        o = jnp.dot(p, v, preferred_element_type=jnp.float32)      # (L, dh)
        o = o * pl.reciprocal(row_sum, approx=True)                # divide after PV
        head_outs.append(o)

    concat = jnp.concatenate(head_outs, axis=-1)                   # (L, C)

    # Fused output projection: (L, C) @ (C, C) + (1, C)
    y = jnp.dot(concat, wo_ref[...], preferred_element_type=jnp.float32)
    y = y + bo_ref[...]
    o_ref[0] = y.astype(o_ref.dtype)                               # lane-dense store


def _mhsa_pallas(x_flat, wqkv, bqkv, wo_t, bo, *, num_heads, dim_head):
    """x_flat: (B, L, C); wqkv: (C, 3C); bqkv: (1, 3C); wo_t: (C, C); bo: (1, C)."""
    B, L, C = x_flat.shape

    kernel = functools.partial(_mhsa_fused_kernel,
                               num_heads=num_heads, dim_head=dim_head)

    itemsize = jnp.dtype(x_flat.dtype).itemsize
    cost = pl.CostEstimate(
        flops=2 * B * L * C * (3 * C)          # QKV projection
              + 4 * B * L * L * C              # QK^T + PV
              + 2 * B * L * C * C,             # output projection
        transcendentals=B * num_heads * L * L, # exp
        bytes_accessed=(2 * B * L * C + 3 * C * C + C * C + 4 * C) * itemsize,
    )

    return pl.pallas_call(
        kernel,
        out_shape=jax.ShapeDtypeStruct((B, L, C), x_flat.dtype),
        grid_spec=pltpu.PrefetchScalarGridSpec(
            num_scalar_prefetch=0,
            grid=(B,),
            in_specs=[
                pl.BlockSpec((1, L, C), lambda b: (b, 0, 0)),      # x
                pl.BlockSpec((C, 3 * C), lambda b: (0, 0)),        # fused QKV weight (resident)
                pl.BlockSpec((1, 3 * C), lambda b: (0, 0)),        # fused QKV bias
                pl.BlockSpec((C, C), lambda b: (0, 0)),            # out-proj weight^T
                pl.BlockSpec((1, C), lambda b: (0, 0)),            # out-proj bias
            ],
            out_specs=pl.BlockSpec((1, L, C), lambda b: (b, 0, 0)),
        ),
        compiler_params=pltpu.CompilerParams(
            dimension_semantics=("parallel",)),
        cost_estimate=cost,
    )(x_flat, wqkv, bqkv, wo_t, bo)


# ----------------------------------------------------------------------------
# One-time parameter preparation (hoisted out of the per-call path)
# ----------------------------------------------------------------------------
def prepare_params(raw_params, *, dim_head):
    """Convert PyTorch nn.MultiheadAttention layouts into fused kernel layouts.

    raw: in_proj_weight (3C, C), in_proj_bias (3C,),
         out_proj_weight (C, C), out_proj_bias (C,)
    out: wqkv (C, 3C) with 1/sqrt(dh) folded into the Q rows, bqkv (1, 3C),
         wo_t (C, C), bo (1, C)
    """
    in_w = jnp.asarray(raw_params["in_proj_weight"])   # (3C, C)
    in_b = jnp.asarray(raw_params["in_proj_bias"])     # (3C,)
    out_w = jnp.asarray(raw_params["out_proj_weight"]) # (C, C)
    out_b = jnp.asarray(raw_params["out_proj_bias"])   # (C,)
    C = out_w.shape[0]

    # Fold the attention scale into the Q projection rows (first C rows).
    scale = 1.0 / (dim_head ** 0.5)
    scale_vec = jnp.concatenate([
        jnp.full((C,), scale, dtype=in_w.dtype),
        jnp.ones((2 * C,), dtype=in_w.dtype),
    ])
    in_w = in_w * scale_vec[:, None]
    in_b = in_b * scale_vec

    return {
        "wqkv": in_w.T,                       # (C, 3C): y = x @ in_w.T
        "bqkv": in_b.reshape(1, 3 * C),
        "wo_t": out_w.T,                      # (C, C):  y = a @ out_w.T
        "bo": out_b.reshape(1, C),
    }


# ----------------------------------------------------------------------------
# Wrapper reproducing TorchMHSAWrapperCl.forward
# ----------------------------------------------------------------------------
def mhsa_cl_forward(x, prepared_params, *, dim_head):
    """x: (B, ..., C) channels-last. Returns attention output with x's shape."""
    restore_shape = x.shape
    B, C = restore_shape[0], restore_shape[-1]
    num_heads = C // dim_head

    x_flat = x.reshape(B, -1, C)                                   # (B, L, C)
    y = _mhsa_pallas(x_flat,
                     prepared_params["wqkv"], prepared_params["bqkv"],
                     prepared_params["wo_t"], prepared_params["bo"],
                     num_heads=num_heads, dim_head=dim_head)
    return y.reshape(restore_shape)


# ----------------------------------------------------------------------------
# Pure-JAX reference (mirrors nn.MultiheadAttention forward, batch_first=True)
# ----------------------------------------------------------------------------
def mhsa_cl_reference(x, raw_params, *, dim_head):
    restore_shape = x.shape
    B, C = restore_shape[0], restore_shape[-1]
    nH, dh = C // dim_head, dim_head
    x_flat = x.reshape(B, -1, C)
    L = x_flat.shape[1]

    in_w, in_b = raw_params["in_proj_weight"], raw_params["in_proj_bias"]
    out_w, out_b = raw_params["out_proj_weight"], raw_params["out_proj_bias"]

    qkv = x_flat @ in_w.T + in_b                                   # (B, L, 3C)
    q, k, v = jnp.split(qkv, 3, axis=-1)

    def split_heads(t):
        return jnp.transpose(t.reshape(B, L, nH, dh), (0, 2, 1, 3))

    q, k, v = split_heads(q), split_heads(k), split_heads(v)
    s = jnp.einsum("bhqd,bhkd->bhqk", q, k) / (dh ** 0.5)
    p = jax.nn.softmax(s, axis=-1)
    o = jnp.einsum("bhqk,bhkd->bhqd", p, v)
    o = jnp.transpose(o, (0, 2, 1, 3)).reshape(B, L, C)
    y = o @ out_w.T + out_b
    return y.reshape(restore_shape)


# ----------------------------------------------------------------------------
if __name__ == "__main__":
    # Small shapes consistent with the module: channels-last (B, H, W, C).
    B, Hs, Ws, C = 2, 4, 4, 64
    dim_head = 32  # -> num_heads = 2

    key = jax.random.PRNGKey(0)
    kx, kw1, kb1, kw2, kb2 = jax.random.split(key, 5)

    x = jax.random.normal(kx, (B, Hs, Ws, C), dtype=jnp.float32)

    # Deterministic synthetic parameters (same shapes as nn.MultiheadAttention).
    raw_params = {
        "in_proj_weight": 0.05 * jax.random.normal(kw1, (3 * C, C), dtype=jnp.float32),
        "in_proj_bias": 0.05 * jax.random.normal(kb1, (3 * C,), dtype=jnp.float32),
        "out_proj_weight": 0.05 * jax.random.normal(kw2, (C, C), dtype=jnp.float32),
        "out_proj_bias": 0.05 * jax.random.normal(kb2, (C,), dtype=jnp.float32),
    }

    # Weight fusion + scale folding done once, outside the forward call.
    params = prepare_params(raw_params, dim_head=dim_head)

    fwd = jax.jit(functools.partial(mhsa_cl_forward, dim_head=dim_head))
    out = fwd(x, params)
    out = jax.block_until_ready(out)

    ref = mhsa_cl_reference(x, raw_params, dim_head=dim_head)
    assert out.shape == x.shape
    # Slightly relaxed tolerance: pl.reciprocal(approx=True) in the softmax denom.
    assert jnp.allclose(out, ref, rtol=1e-3, atol=1e-3), "mismatch vs reference"

    print("KERNEL_OK")
</pallas_src>

<mosaic_0001>
module attributes {stable_mosaic.version = 11 : i64} {
  func.func @_mhsa_fused_kernel(%arg0: i32, %arg1: memref<1x16x64xf32, #tpu.memory_space<vmem>>, %arg2: memref<64x192xf32, #tpu.memory_space<vmem>>, %arg3: memref<1x192xf32, #tpu.memory_space<vmem>>, %arg4: memref<64x64xf32, #tpu.memory_space<vmem>>, %arg5: memref<1x64xf32, #tpu.memory_space<vmem>>, %arg6: memref<1x16x64xf32, #tpu.memory_space<vmem>>) attributes {dimension_semantics = [#tpu.dimension_semantics<parallel>], iteration_bounds = array<i64: 2>, scalar_prefetch = 0 : i64, scratch_operands = 0 : i64, tpu.core_type = #tpu.core_type<tc>, window_params = [{transform_indices = @transform_0, window_bounds = array<i64: 1, 16, 64>}, {pipeline_mode = #tpu.pipeline_mode<synchronous>, transform_indices = @transform_1, window_bounds = array<i64: 64, 192>}, {pipeline_mode = #tpu.pipeline_mode<synchronous>, transform_indices = @transform_2, window_bounds = array<i64: 1, 192>}, {pipeline_mode = #tpu.pipeline_mode<synchronous>, transform_indices = @transform_3, window_bounds = array<i64: 64, 64>}, {pipeline_mode = #tpu.pipeline_mode<synchronous>, transform_indices = @transform_4, window_bounds = array<i64: 1, 64>}, {transform_indices = @transform_5, window_bounds = array<i64: 1, 16, 64>}]} {
    %c0 = arith.constant 0 : index
    %c0_0 = arith.constant 0 : index
    %c0_1 = arith.constant 0 : index
    %0 = vector.load %arg1[%c0, %c0_0, %c0_1] : memref<1x16x64xf32, #tpu.memory_space<vmem>>, vector<1x16x64xf32>
    %1 = vector.shape_cast %0 : vector<1x16x64xf32> to vector<16x64xf32>
    %c0_2 = arith.constant 0 : index
    %c0_3 = arith.constant 0 : index
    %2 = vector.load %arg2[%c0_2, %c0_3] : memref<64x192xf32, #tpu.memory_space<vmem>>, vector<64x192xf32>
    %cst = arith.constant dense<0.000000e+00> : vector<16x192xf32>
    %3 = tpu.matmul %1, %2, %cst {dimension_numbers = #tpu.dot_dimension_numbers<[1], [0], [0], [1], [0, 0, 1, 1], [], []>} : vector<16x64xf32>, vector<64x192xf32>, vector<16x192xf32> -> vector<16x192xf32>
    %c0_4 = arith.constant 0 : index
    %c0_5 = arith.constant 0 : index
    %4 = vector.load %arg3[%c0_4, %c0_5] : memref<1x192xf32, #tpu.memory_space<vmem>>, vector<1x192xf32>
    %5 = vector.broadcast %4 : vector<1x192xf32> to vector<16x192xf32>
    %6 = arith.addf %3, %5 : vector<16x192xf32>
    %7 = vector.extract_strided_slice %6 {offsets = [0, 0], sizes = [16, 32], strides = [1, 1]} : vector<16x192xf32> to vector<16x32xf32>
    %8 = vector.extract_strided_slice %6 {offsets = [0, 64], sizes = [16, 32], strides = [1, 1]} : vector<16x192xf32> to vector<16x32xf32>
    %9 = vector.extract_strided_slice %6 {offsets = [0, 128], sizes = [16, 32], strides = [1, 1]} : vector<16x192xf32> to vector<16x32xf32>
    %cst_6 = arith.constant dense<0.000000e+00> : vector<16x16xf32>
    %10 = tpu.matmul %7, %8, %cst_6 {dimension_numbers = #tpu.dot_dimension_numbers<[1], [1], [0], [0], [0, 0, 1, 0], [], []>} : vector<16x32xf32>, vector<16x32xf32>, vector<16x16xf32> -> vector<16x16xf32>
    %cst_7 = arith.constant dense<0xFF800000> : vector<16xf32>
    %11 = vector.multi_reduction <maximumf>, %10, %cst_7 [1] : vector<16x16xf32> to vector<16xf32>
    %12 = vector.shape_cast %11 : vector<16xf32> to vector<16x1xf32>
    %13 = vector.broadcast %12 : vector<16x1xf32> to vector<16x16xf32>
    %14 = arith.subf %10, %13 : vector<16x16xf32>
    %15 = math.exp %14 : vector<16x16xf32>
    %cst_8 = arith.constant dense<0.000000e+00> : vector<16xf32>
    %16 = vector.multi_reduction <add>, %15, %cst_8 [1] : vector<16x16xf32> to vector<16xf32>
    %17 = vector.shape_cast %16 : vector<16xf32> to vector<16x1xf32>
    %cst_9 = arith.constant dense<0.000000e+00> : vector<16x32xf32>
    %18 = tpu.matmul %15, %9, %cst_9 {dimension_numbers = #tpu.dot_dimension_numbers<[1], [0], [0], [1], [0, 0, 1, 1], [], []>} : vector<16x16xf32>, vector<16x32xf32>, vector<16x32xf32> -> vector<16x32xf32>
    %19 = tpu.reciprocal %17 {approx = true} : vector<16x1xf32> -> vector<16x1xf32>
    %20 = vector.broadcast %19 : vector<16x1xf32> to vector<16x32xf32>
    %21 = arith.mulf %18, %20 : vector<16x32xf32>
    %22 = vector.extract_strided_slice %6 {offsets = [0, 32], sizes = [16, 32], strides = [1, 1]} : vector<16x192xf32> to vector<16x32xf32>
    %23 = vector.extract_strided_slice %6 {offsets = [0, 96], sizes = [16, 32], strides = [1, 1]} : vector<16x192xf32> to vector<16x32xf32>
    %24 = vector.extract_strided_slice %6 {offsets = [0, 160], sizes = [16, 32], strides = [1, 1]} : vector<16x192xf32> to vector<16x32xf32>
    %cst_10 = arith.constant dense<0.000000e+00> : vector<16x16xf32>
    %25 = tpu.matmul %22, %23, %cst_10 {dimension_numbers = #tpu.dot_dimension_numbers<[1], [1], [0], [0], [0, 0, 1, 0], [], []>} : vector<16x32xf32>, vector<16x32xf32>, vector<16x16xf32> -> vector<16x16xf32>
    %cst_11 = arith.constant dense<0xFF800000> : vector<16xf32>
    %26 = vector.multi_reduction <maximumf>, %25, %cst_11 [1] : vector<16x16xf32> to vector<16xf32>
    %27 = vector.shape_cast %26 : vector<16xf32> to vector<16x1xf32>
    %28 = vector.broadcast %27 : vector<16x1xf32> to vector<16x16xf32>
    %29 = arith.subf %25, %28 : vector<16x16xf32>
    %30 = math.exp %29 : vector<16x16xf32>
    %cst_12 = arith.constant dense<0.000000e+00> : vector<16xf32>
    %31 = vector.multi_reduction <add>, %30, %cst_12 [1] : vector<16x16xf32> to vector<16xf32>
    %32 = vector.shape_cast %31 : vector<16xf32> to vector<16x1xf32>
    %cst_13 = arith.constant dense<0.000000e+00> : vector<16x32xf32>
    %33 = tpu.matmul %30, %24, %cst_13 {dimension_numbers = #tpu.dot_dimension_numbers<[1], [0], [0], [1], [0, 0, 1, 1], [], []>} : vector<16x16xf32>, vector<16x32xf32>, vector<16x32xf32> -> vector<16x32xf32>
    %34 = tpu.reciprocal %32 {approx = true} : vector<16x1xf32> -> vector<16x1xf32>
    %35 = vector.broadcast %34 : vector<16x1xf32> to vector<16x32xf32>
    %36 = arith.mulf %33, %35 : vector<16x32xf32>
    %37 = tpu.concatenate %21, %36 in 1 : vector<16x32xf32>, vector<16x32xf32> -> vector<16x64xf32>
    %c0_14 = arith.constant 0 : index
    %c0_15 = arith.constant 0 : index
    %38 = vector.load %arg4[%c0_14, %c0_15] : memref<64x64xf32, #tpu.memory_space<vmem>>, vector<64x64xf32>
    %cst_16 = arith.constant dense<0.000000e+00> : vector<16x64xf32>
    %39 = tpu.matmul %37, %38, %cst_16 {dimension_numbers = #tpu.dot_dimension_numbers<[1], [0], [0], [1], [0, 0, 1, 1], [], []>} : vector<16x64xf32>, vector<64x64xf32>, vector<16x64xf32> -> vector<16x64xf32>
    %c0_17 = arith.constant 0 : index
    %c0_18 = arith.constant 0 : index
    %40 = vector.load %arg5[%c0_17, %c0_18] : memref<1x64xf32, #tpu.memory_space<vmem>>, vector<1x64xf32>
    %41 = vector.broadcast %40 : vector<1x64xf32> to vector<16x64xf32>
    %42 = arith.addf %39, %41 : vector<16x64xf32>
    %c0_19 = arith.constant 0 : index
    %c0_20 = arith.constant 0 : index
    %c0_21 = arith.constant 0 : index
    %43 = vector.load %arg6[%c0_19, %c0_20, %c0_21] : memref<1x16x64xf32, #tpu.memory_space<vmem>>, vector<1x16x64xf32>
    %44 = vector.shape_cast %43 : vector<1x16x64xf32> to vector<16x64xf32>
    %45 = vector.shape_cast %42 : vector<16x64xf32> to vector<1x16x64xf32>
    tpu.vector_store %arg6[%c0_19, %c0_20, %c0_21], %45 {strides = array<i32>} : memref<1x16x64xf32, #tpu.memory_space<vmem>>, vector<1x16x64xf32>,
    return
  }
  func.func @transform_0(%arg0: i32) -> (i32, i32, i32) {
    %c0_i32 = arith.constant 0 : i32
    %c0_i32_0 = arith.constant 0 : i32
    %c0_i32_1 = arith.constant 0 : i32
    return %arg0, %c0_i32, %c0_i32_0 : i32, i32, i32
  }
  func.func @transform_1(%arg0: i32) -> (i32, i32) {
    %c0_i32 = arith.constant 0 : i32
    %c0_i32_0 = arith.constant 0 : i32
    %c0_i32_1 = arith.constant 0 : i32
    return %c0_i32, %c0_i32_0 : i32, i32
  }
  func.func @transform_2(%arg0: i32) -> (i32, i32) {
    %c0_i32 = arith.constant 0 : i32
    %c0_i32_0 = arith.constant 0 : i32
    %c0_i32_1 = arith.constant 0 : i32
    return %c0_i32, %c0_i32_0 : i32, i32
  }
  func.func @transform_3(%arg0: i32) -> (i32, i32) {
    %c0_i32 = arith.constant 0 : i32
    %c0_i32_0 = arith.constant 0 : i32
    %c0_i32_1 = arith.constant 0 : i32
    return %c0_i32, %c0_i32_0 : i32, i32
  }
  func.func @transform_4(%arg0: i32) -> (i32, i32) {
    %c0_i32 = arith.constant 0 : i32
    %c0_i32_0 = arith.constant 0 : i32
    %c0_i32_1 = arith.constant 0 : i32
    return %c0_i32, %c0_i32_0 : i32, i32
  }
  func.func @transform_5(%arg0: i32) -> (i32, i32, i32) {
    %c0_i32 = arith.constant 0 : i32
    %c0_i32_0 = arith.constant 0 : i32
    %c0_i32_1 = arith.constant 0 : i32
    return %arg0, %c0_i32, %c0_i32_0 : i32, i32, i32
  }
}

</mosaic_0001>

<llo_original>
// kernel: mhsa_cl_forward.1
$region0: #{mhsa_cl_forward.1}
  #allocation0 [shape = 'u32[]', space=smem, size = 0x4, offset = 0x4, fixed_abs, tag = 'smem constant byte address 0x4 - core index']
  #allocation1 [shape = 'u32[144,128]{1,0:T(1,128)}', space=vmem, size = 0x12000, scoped, tag = 'internal scratch']
  %s0 = inlined_call_operand.hbm [shape: f32[2,16,64], index: 0, kind: input, shape index: {}]
  %s1 = inlined_call_operand.hbm [shape: f32[64,192], index: 1, kind: input, shape index: {}]
  %s2 = inlined_call_operand.vmem [shape: f32[1,192], index: 2, kind: input, shape index: {}]
  %s3 = inlined_call_operand.hbm [shape: f32[64,64], index: 3, kind: input, shape index: {}]
  %s4 = inlined_call_operand.vmem [shape: f32[1,64], index: 4, kind: input, shape index: {}]
  %s5 = inlined_call_operand.hbm [shape: f32[2,16,64], index: 5, kind: output, shape index: {}]
  %s6 = sld [smem:[#allocation0]]
  $region65: #{mhsa_cl_forward.1} parent=0
    _
  %s8 = ssub.s32 1, %s6
  %s9 = scalar_select 0, %s8, %s6
  $region1: #{mhsa_cl_forward.1} parent=0
    #allocation2 [shape = 'u8[16384]{0}', space=vmem, size = 0x4000, scoped, tag = 'input window, operand 0']
    #allocation3 [shape = 's32[2]{0}', space=sflag, size = 0x8, scoped, tag = 'scoped memory for mhsa_cl_forward.1']
    #allocation4 [shape = 's32[2]{0}', space=sflag, size = 0x8, scoped, tag = 'scoped memory for mhsa_cl_forward.1']
    #allocation5 [shape = 'u8[65536]{0}', space=vmem, size = 0x10000, scoped, tag = 'input window, operand 1, single buffered']
    #allocation6 [shape = 's32[1]{0}', space=sflag, size = 0x4, scoped, tag = 'scoped memory for mhsa_cl_forward.1']
    #allocation7 [shape = 'u8[32768]{0}', space=vmem, size = 0x8000, scoped, tag = 'input window, operand 3, single buffered']
    #allocation8 [shape = 'u8[16384]{0}', space=vmem, size = 0x4000, scoped, tag = 'output window, operand 0']
    %10 = vsyncpa [#allocation3], 0
    %s11 = scalar_lea.sflag [#allocation3], 1
    %12 = vsyncpa %s11, 0
    %13 = vsyncpa [#allocation6], 0
    %14 = vsyncpa [#allocation4], 0
    %s15 = scalar_lea.sflag [#allocation4], 1
    %16 = vsyncpa %s15, 0
    loop: start=0, step=1, limit=4
    $region2: #{mhsa_cl_forward.1} parent=1 // loop_pre_header
      _
    $region3: #{mhsa_cl_forward.1} parent=1 // loop_header
      %s18 = sphi 0, %s22
      %p19 = scmp.ge.s32.totalorder %s18, 4
      %s28 = sphi 0, %s30
      %s31 = sphi 0, %s28
      %s32 = sphi 0, %s31
      %s48 = sphi 0, %s32
      %s52 = sphi 0, %s52
      %s54 = sphi 0, %s52
      %s55 = sphi 0, %s54
      %s69 = sphi 0, %s55
      %s73 = sphi 0, %s73
      %s75 = sphi 0, %s73
      %s76 = sphi 0, %s75
      %s90 = sphi 0, %s76
      %s94 = sphi 0, %s94
      %s96 = sphi 0, %s94
      %s97 = sphi 0, %s96
      %s111 = sphi 0, %s97
      %s115 = sphi 0, %s115
      %s117 = sphi 0, %s115
      %s118 = sphi 0, %s117
      %s132 = sphi 0, %s118
      %s138 = sphi 0, %s140
      %s141 = sphi 0, %s138
      %s142 = sphi 0, %s141
      %s158 = sphi 0, %s142
    $region4: #{mhsa_cl_forward.1} parent=1 // loop_header_branch
      %21 = sbr.rel (%p19) target = $region8
    $region5: #{mhsa_cl_forward.1} parent=1 // loop_body
      %s23 = ssub.s32 %s18, 1
      %s24 = ssub.s32 %s18, 2
      %s25 = sadd.s32 %s18, 1
      %s26 = ssub.s32 %s18, %s25
      %p27 = scmp.eq.s32.totalorder %s26, 0
      %s29 = sadd.s32 %s28, 1
      %s30 = scalar_select %p27, %s28, %s29
      %p33 = pneg %p27
      %p34 = scmp.eq.s32.totalorder %s18, 1
      %p35 = por %p33, %p34
      %p36 = scmp.ne.s32.totalorder %s28, %s31
      %p37 = scmp.eq.s32.totalorder %s18, 0
      %p38 = por %p36, %p37
      %p39 = scmp.ne.s32.totalorder %s28, %s31
      %p40 = scmp.eq.s32.totalorder %s23, 1
      %p41 = por %p39, %p40
      %p42 = scmp.ne.s32.totalorder %s31, %s32
      %p43 = scmp.eq.s32.totalorder %s23, 0
      %p44 = por %p42, %p43
      %p45 = scmp.ne.s32.totalorder %s31, %s32
      %p46 = scmp.eq.s32.totalorder %s24, 1
      %p47 = por %p45, %p46
      %p49 = scmp.ne.s32.totalorder %s32, %s48
      %p50 = scmp.eq.s32.totalorder %s24, 0
      %p51 = por %p49, %p50
      %s53 = sadd.s32 %s52, 1
      %p56 = scmp.eq.s32.totalorder %s18, 1
      %p57 = scmp.ne.s32.totalorder %s52, %s54
      %p58 = scmp.eq.s32.totalorder %s18, 0
      %p59 = por %p57, %p58
      %p60 = scmp.ne.s32.totalorder %s52, %s54
      %p61 = scmp.eq.s32.totalorder %s23, 1
      %p62 = por %p60, %p61
      %p63 = scmp.ne.s32.totalorder %s54, %s55
      %p64 = scmp.eq.s32.totalorder %s23, 0
      %p65 = por %p63, %p64
      %p66 = scmp.ne.s32.totalorder %s54, %s55
      %p67 = scmp.eq.s32.totalorder %s24, 1
      %p68 = por %p66, %p67
      %p70 = scmp.ne.s32.totalorder %s55, %s69
      %p71 = scmp.eq.s32.totalorder %s24, 0
      %p72 = por %p70, %p71
      %s74 = sadd.s32 %s73, 1
      %p77 = scmp.eq.s32.totalorder %s18, 1
      %p78 = scmp.ne.s32.totalorder %s73, %s75
      %p79 = scmp.eq.s32.totalorder %s18, 0
      %p80 = por %p78, %p79
      %p81 = scmp.ne.s32.totalorder %s73, %s75
      %p82 = scmp.eq.s32.totalorder %s23, 1
      %p83 = por %p81, %p82
      %p84 = scmp.ne.s32.totalorder %s75, %s76
      %p85 = scmp.eq.s32.totalorder %s23, 0
      %p86 = por %p84, %p85
      %p87 = scmp.ne.s32.totalorder %s75, %s76
      %p88 = scmp.eq.s32.totalorder %s24, 1
      %p89 = por %p87, %p88
      %p91 = scmp.ne.s32.totalorder %s76, %s90
      %p92 = scmp.eq.s32.totalorder %s24, 0
      %p93 = por %p91, %p92
      %s95 = sadd.s32 %s94, 1
      %p98 = scmp.eq.s32.totalorder %s18, 1
      %p99 = scmp.ne.s32.totalorder %s94, %s96
      %p100 = scmp.eq.s32.totalorder %s18, 0
      %p101 = por %p99, %p100
      %p102 = scmp.ne.s32.totalorder %s94, %s96
      %p103 = scmp.eq.s32.totalorder %s23, 1
      %p104 = por %p102, %p103
      %p105 = scmp.ne.s32.totalorder %s96, %s97
      %p106 = scmp.eq.s32.totalorder %s23, 0
      %p107 = por %p105, %p106
      %p108 = scmp.ne.s32.totalorder %s96, %s97
      %p109 = scmp.eq.s32.totalorder %s24, 1
      %p110 = por %p108, %p109
      %p112 = scmp.ne.s32.totalorder %s97, %s111
      %p113 = scmp.eq.s32.totalorder %s24, 0
      %p114 = por %p112, %p113
      %s116 = sadd.s32 %s115, 1
      %p119 = scmp.eq.s32.totalorder %s18, 1
      %p120 = scmp.ne.s32.totalorder %s115, %s117
      %p121 = scmp.eq.s32.totalorder %s18, 0
      %p122 = por %p120, %p121
      %p123 = scmp.ne.s32.totalorder %s115, %s117
      %p124 = scmp.eq.s32.totalorder %s23, 1
      %p125 = por %p123, %p124
      %p126 = scmp.ne.s32.totalorder %s117, %s118
      %p127 = scmp.eq.s32.totalorder %s23, 0
      %p128 = por %p126, %p127
      %p129 = scmp.ne.s32.totalorder %s117, %s118
      %p130 = scmp.eq.s32.totalorder %s24, 1
      %p131 = por %p129, %p130
      %p133 = scmp.ne.s32.totalorder %s118, %s132
      %p134 = scmp.eq.s32.totalorder %s24, 0
      %p135 = por %p133, %p134
      %s136 = ssub.s32 %s18, %s25
      %p137 = scmp.eq.s32.totalorder %s136, 0
      %s139 = sadd.s32 %s138, 1
      %s140 = scalar_select %p137, %s138, %s139
      %p143 = pneg %p137
      %p144 = scmp.eq.s32.totalorder %s18, 1
      %p145 = por %p143, %p144
      %p146 = scmp.ne.s32.totalorder %s138, %s141
      %p147 = scmp.eq.s32.totalorder %s18, 0
      %p148 = por %p146, %p147
      %p149 = scmp.ne.s32.totalorder %s138, %s141
      %p150 = scmp.eq.s32.totalorder %s23, 1
      %p151 = por %p149, %p150
      %p152 = scmp.ne.s32.totalorder %s141, %s142
      %p153 = scmp.eq.s32.totalorder %s23, 0
      %p154 = por %p152, %p153
      %p155 = scmp.ne.s32.totalorder %s141, %s142
      %p156 = scmp.eq.s32.totalorder %s24, 1
      %p157 = por %p155, %p156
      %p159 = scmp.ne.s32.totalorder %s142, %s158
      %p160 = scmp.eq.s32.totalorder %s24, 0
      %p161 = por %p159, %p160
      %p162 = scmp.le.s32.totalorder 1, %s18
      %p163 = scmp.lt.s32.totalorder %s18, 3
      %p164 = pnand %p162, %p163
      %p165 = pneg %p164
      // Predicated region
      $region9: #{mhsa_cl_forward.1} parent=5 // pred_check
        _
      $region10: #{mhsa_cl_forward.1} parent=5 // pred_check_branch
        %167 = sbr.rel (%p164) target = $region12
      $region11: #{mhsa_cl_forward.1} parent=5 // pred_region
        %s168 = ssub.s32 %s18, 1
        // Predicated region
        $region13: #{mhsa_cl_forward.1} parent=11 // pred_check
          %p169 = pneg %p65
        $region14: #{mhsa_cl_forward.1} parent=11 // pred_check_branch
          %171 = sbr.rel (%p169) target = $region16
        $region15: #{mhsa_cl_forward.1} parent=11 // pred_region
          %s173 = ssub.s32 2048, 2048
          %174 = vsyncadd [#allocation6], %s173
          %s175 = sshll.u32 [#allocation5], 4
          %s176 = int_to_ptr.vmem [resolvable:$true] %s175
          %181 = dma.hbm_to_vmem [thread:$0]  %s1, 2048, %s176, [#allocation6], 256, 256, 16
        $region16: #{mhsa_cl_forward.1} parent=11 // pred_fallthru
          _
        // Predicated region
        $region17: #{mhsa_cl_forward.1} parent=11 // pred_check
          %p182 = pneg %p86
        $region18: #{mhsa_cl_forward.1} parent=11 // pred_check_branch
          %184 = sbr.rel (%p182) target = $region20
        $region19: #{mhsa_cl_forward.1} parent=11 // pred_region
          _
        $region20: #{mhsa_cl_forward.1} parent=11 // pred_fallthru
          _
        // Predicated region
        $region21: #{mhsa_cl_forward.1} parent=11 // pred_check
          %p185 = pneg %p107
        $region22: #{mhsa_cl_forward.1} parent=11 // pred_check_branch
          %187 = sbr.rel (%p185) target = $region24
        $region23: #{mhsa_cl_forward.1} parent=11 // pred_region
          %s189 = ssub.s32 1024, 1024
          %190 = vsyncadd [#allocation6], %s189
          %s191 = sshll.u32 [#allocation7], 4
          %s192 = int_to_ptr.vmem [resolvable:$true] %s191
          %197 = dma.hbm_to_vmem [thread:$0]  %s3, 1024, %s192, [#allocation6], 128, 128, 8
        $region24: #{mhsa_cl_forward.1} parent=11 // pred_fallthru
          _
        // Predicated region
        $region25: #{mhsa_cl_forward.1} parent=11 // pred_check
          %p198 = pneg %p128
        $region26: #{mhsa_cl_forward.1} parent=11 // pred_check_branch
          %200 = sbr.rel (%p198) target = $region28
        $region27: #{mhsa_cl_forward.1} parent=11 // pred_region
          _
        $region28: #{mhsa_cl_forward.1} parent=11 // pred_fallthru
          _
      $region12: #{mhsa_cl_forward.1} parent=5 // pred_fallthru
        _
      %p201 = scmp.lt.s32.totalorder %s18, 2
      // Predicated region
      $region29: #{mhsa_cl_forward.1} parent=5 // pred_check
        %p202 = pneg %p201
      $region30: #{mhsa_cl_forward.1} parent=5 // pred_check_branch
        %204 = sbr.rel (%p202) target = $region32
      $region31: #{mhsa_cl_forward.1} parent=5 // pred_region
        // Predicated region
        $region33: #{mhsa_cl_forward.1} parent=31 // pred_check
          %p205 = pneg %p38
        $region34: #{mhsa_cl_forward.1} parent=31 // pred_check_branch
          %207 = sbr.rel (%p205) target = $region36
        $region35: #{mhsa_cl_forward.1} parent=31 // pred_region
          %s208 = sand.u32 %s28, 1
          %s209 = scalar_lea.sflag [#allocation3], %s208
          %s210 = sand.u32 %s28, 1
          %s211 = smul.addr %s210, 16
          %s212 = scalar_lea.vmem [#allocation2], %s211
          %s214 = ssub.s32 256, 256
          %215 = vsyncadd %s209, %s214
          %s216 = smul.addr %s18, 2
          %s217 = smul.addr %s216, 128
          %s218 = scalar_lea.hbm %s0, %s217
          %s219 = sshll.u32 %s212, 4
          %s220 = int_to_ptr.vmem [resolvable:$true] %s219
          %225 = dma.hbm_to_vmem [thread:$0]  %s218, 256, %s220, %s209, 128, 128, 8
        $region36: #{mhsa_cl_forward.1} parent=31 // pred_fallthru
          _
      $region32: #{mhsa_cl_forward.1} parent=5 // pred_fallthru
        _
      %p226 = scmp.le.s32.totalorder 1, %s18
      %p227 = scmp.lt.s32.totalorder %s18, 3
      %p228 = pnand %p226, %p227
      %p229 = pneg %p228
      // Predicated region
      $region37: #{mhsa_cl_forward.1} parent=5 // pred_check
        _
      $region38: #{mhsa_cl_forward.1} parent=5 // pred_check_branch
        %231 = sbr.rel (%p228) target = $region40
      $region39: #{mhsa_cl_forward.1} parent=5 // pred_region
        %s232 = ssub.s32 %s18, 1
        %s233 = sand.u32 %s31, 1
        %s234 = scalar_lea.sflag [#allocation3], %s233
        %s235 = sand.u32 %s31, 1
        %s236 = smul.addr %s235, 16
        %s237 = scalar_lea.vmem [#allocation2], %s236
        // Predicated region
        $region41: #{mhsa_cl_forward.1} parent=39 // pred_check
          %p238 = pneg %p44
        $region42: #{mhsa_cl_forward.1} parent=39 // pred_check_branch
          %240 = sbr.rel (%p238) target = $region44
        $region43: #{mhsa_cl_forward.1} parent=39 // pred_region
          %241 = dma.done %s234, 256
        $region44: #{mhsa_cl_forward.1} parent=39 // pred_fallthru
          _
        // Predicated region
        $region45: #{mhsa_cl_forward.1} parent=39 // pred_check
          %p242 = pneg %p65
        $region46: #{mhsa_cl_forward.1} parent=39 // pred_check_branch
          %244 = sbr.rel (%p242) target = $region48
        $region47: #{mhsa_cl_forward.1} parent=39 // pred_region
          %245 = dma.done [#allocation6], 2048
        $region48: #{mhsa_cl_forward.1} parent=39 // pred_fallthru
          _
        // Predicated region
        $region49: #{mhsa_cl_forward.1} parent=39 // pred_check
          %p246 = pneg %p107
        $region50: #{mhsa_cl_forward.1} parent=39 // pred_check_branch
          %248 = sbr.rel (%p246) target = $region52
        $region51: #{mhsa_cl_forward.1} parent=39 // pred_region
          %249 = dma.done [#allocation6], 1024
        $region52: #{mhsa_cl_forward.1} parent=39 // pred_fallthru
          _
        %s250 = sand.u32 %s31, 1
        %s251 = scalar_lea.sflag [#allocation3], %s250
        %s252 = sand.u32 %s31, 1
        %s253 = smul.addr %s252, 16
        %s254 = scalar_lea.vmem [#allocation2], %s253
        %p255 = pneg %p44
        %p256 = pneg %p41
        %p257 = pneg %p65
        %p258 = pneg %p62
        %p259 = pneg %p86
        %p260 = pneg %p83
        %p261 = pneg %p107
        %p262 = pneg %p104
        %p263 = pneg %p128
        %p264 = pneg %p125
        %p265 = pneg %p154
        %p266 = pneg %p151
        %s267 = sand.u32 %s141, 1
        %s268 = scalar_lea.sflag [#allocation4], %s267
        %s269 = sand.u32 %s141, 1
        %s270 = smul.addr %s269, 16
        %s271 = scalar_lea.vmem [#allocation8], %s270
        %v272 = vld [vmem:[%s237] sm:$0xff]
        %v273 = vld [vmem:[%s237 + $0x8] sm:$0xff]
        %v274 = vld [vmem:[#allocation5] sm:$0xff]
        %v275 = vld [vmem:[#allocation5 + $0x8] sm:$0xff]
        %v276 = vld [vmem:[#allocation5 + $0x10] sm:$0xff]
        %v277 = vld [vmem:[#allocation5 + $0x18] sm:$0xff]
        %v278 = vld [vmem:[#allocation5 + $0x20] sm:$0xff]
        %v279 = vld [vmem:[#allocation5 + $0x28] sm:$0xff]
        %v280 = vld [vmem:[#allocation5 + $0x30] sm:$0xff]
        %v281 = vld [vmem:[#allocation5 + $0x38] sm:$0xff]
        %v282 = vld [vmem:[#allocation5 + $0x40] sm:$0xff]
        %v283 = vld [vmem:[#allocation5 + $0x48] sm:$0xff]
        %v284 = vld [vmem:[#allocation5 + $0x50] sm:$0xff]
        %v285 = vld [vmem:[#allocation5 + $0x58] sm:$0xff]
        %v286 = vld [vmem:[#allocation5 + $0x60] sm:$0xff]
        %v287 = vld [vmem:[#allocation5 + $0x68] sm:$0xff]
        %v288 = vld [vmem:[#allocation5 + $0x70] sm:$0xff]
        %v289 = vld [vmem:[#allocation5 + $0x78] sm:$0xff]
        %v290 = vld [vmem:[%s2] sm:$0x3]
        %v292 = vlaneseq
        %v293 = vshrl.u32 %v292, 7
        %v294 = vsub.s32 0, %v293
        %v295 = vrot.slane %v290, %v294
        %v296 = vlaneseq
        %v297 = vshrl.u32 %v296, 7
        %v298 = vsub.s32 1, %v297
        %v299 = vrot.slane %v290, %v298
        %vm302 = vcmask 523264
        %v304 = vsel %vm302, %v272, 0
        %v307 = vsel %vm302, %v273, 0
        %309 = vmatprep.subr.mxu0 %v275
        %310 = vmatpush1.msra.mxu0 %v274
        %311 = vmatprep.subr.mxu0 %v277
        %312 = vmatpush1.msra.mxu0 %v276
        %313 = vmatprep.subr.mxu0 %v279
        %314 = vmatpush1.msra.mxu0 %v278
        %315 = vmatprep.subr.mxu0 %v281
        %316 = vmatpush1.msra.mxu0 %v280
        %317 = vmatprep.subr.mxu0 %v283
        %318 = vmatpush1.msra.mxu0 %v282
        %319 = vmatprep.subr.mxu0 %v285
        %320 = vmatpush1.msra.mxu0 %v284
        %321 = vmatprep.subr.mxu0 %v287
        %322 = vmatpush1.msra.mxu0 %v286
        %323 = vmatprep.subr.mxu0 %v289
        %324 = vmatpush1.msra.mxu0 %v288
        %325 = vmatprep.subr.mxu0 0.0
        %326 = vmatpush1.msra.mxu0 0.0
        %327 = vmatprep.subr.mxu0 0.0
        %328 = vmatpush1.msra.mxu0 0.0
        %329 = vmatprep.subr.mxu0 0.0
        %330 = vmatpush1.msra.mxu0 0.0
        %331 = vmatprep.subr.mxu0 0.0
        %332 = vmatpush1.msra.mxu0 0.0
        %333 = vmatprep.subr.mxu0 0.0
        %334 = vmatpush1.msra.mxu0 0.0
        %335 = vmatprep.subr.mxu0 0.0
        %336 = vmatpush1.msra.mxu0 0.0
        %337 = vmatprep.subr.mxu0 0.0
        %338 = vmatpush1.msra.mxu0 0.0
        %339 = vmatprep.subr.mxu0 0.0
        %340 = vmatpush1.msra.mxu0 0.0
        %341 = vmatprep.subr.mxu0 0.0
        %342 = vmatpush1.msra.mxu0 0.0
        %343 = vmatprep.subr.mxu0 0.0
        %344 = vmatpush1.msra.mxu0 0.0
        %345 = vmatprep.subr.mxu0 0.0
        %346 = vmatpush1.msra.mxu0 0.0
        %347 = vmatprep.subr.mxu0 0.0
        %348 = vmatpush1.msra.mxu0 0.0
        %349 = vmatprep.subr.mxu0 0.0
        %350 = vmatpush1.msra.mxu0 0.0
        %351 = vmatprep.subr.mxu0 0.0
        %352 = vmatpush1.msra.mxu0 0.0
        %353 = vmatprep.subr.mxu0 0.0
        %354 = vmatpush1.msra.mxu0 0.0
        %355 = vmatprep.subr.mxu0 0.0
        %356 = vmatpush1.msra.mxu0 0.0
        %357 = vmatprep.subr.mxu0 0.0
        %358 = vmatpush1.msra.mxu0 0.0
        %359 = vmatprep.subr.mxu0 0.0
        %360 = vmatpush1.msra.mxu0 0.0
        %361 = vmatprep.subr.mxu0 0.0
        %362 = vmatpush1.msra.mxu0 0.0
        %363 = vmatprep.subr.mxu0 0.0
        %364 = vmatpush1.msra.mxu0 0.0
        %365 = vmatprep.subr.mxu0 0.0
        %366 = vmatpush1.msra.mxu0 0.0
        %367 = vmatprep.subr.mxu0 0.0
        %368 = vmatpush1.msra.mxu0 0.0
        %369 = vmatprep.subr.mxu0 0.0
        %370 = vmatpush1.msra.mxu0 0.0
        %371 = vmatprep.subr.mxu0 0.0
        %372 = vmatpush1.msra.mxu0 0.0
        %373 = vmatprep.mubr.f32.mxu0 0.0
        %374 = vmatmul.mubr.f32.gmra.mrb[0].mxu0 %v304
        %v375 = vpop.f32.mrb[0].mxu0
        %v376 = vadd.f32 %v295, %v375
        %v377 = vpop.f32.mrb[0].mxu0
        %v378 = vadd.f32 %v299, %v377
        %379 = vmatprep.mubr.f32.mxu0 0.0
        %380 = vmatmul.mubr.f32.gmra.mrb[0].mxu0 %v307
        %v381 = vpop.f32.mrb[0].mxu0
        %v382 = vadd.f32 %v295, %v381
        %v383 = vpop.f32.mrb[0].mxu0
        %v384 = vadd.f32 %v299, %v383
        %385 = vdwg.mxu0
        %388 = vrot.lane.b32.xlu0 %v376, 64
        %v389 = vpop.permute.xlu0 %388
        %390 = vrot.lane.b32.xlu0 %v382, 64
        %v391 = vpop.permute.xlu0 %390
        %vm392 = vcmask 261120
        %v393 = vsel %vm392, %v376, 0
        %v395 = vsel %vm392, %v382, 0
        %v397 = vsel %vm392, %v389, 0
        %v399 = vsel %vm392, %v391, 0
        %401 = vmatprep.subr.mxu0 0.0
        %402 = vmatpush1.xpose.msra.mxu0 %v397
        %403 = vmatprep.subr.mxu0 0.0
        %404 = vmatpush1.xpose.msra.mxu0 %v399
        %405 = vmatprep.subr.mxu0 0.0
        %406 = vmatpush1.xpose.msra.mxu0 0.0
        %407 = vmatprep.subr.mxu0 0.0
        %408 = vmatpush1.xpose.msra.mxu0 0.0
        %409 = vmatprep.subr.mxu0 0.0
        %410 = vmatpush1.xpose.msra.mxu0 0.0
        %411 = vmatprep.subr.mxu0 0.0
        %412 = vmatpush1.xpose.msra.mxu0 0.0
        %413 = vmatprep.subr.mxu0 0.0
        %414 = vmatpush1.xpose.msra.mxu0 0.0
        %415 = vmatprep.subr.mxu0 0.0
        %416 = vmatpush1.xpose.msra.mxu0 0.0
        %417 = vmatprep.subr.mxu0 0.0
        %418 = vmatpush1.xpose.msra.mxu0 0.0
        %419 = vmatprep.subr.mxu0 0.0
        %420 = vmatpush1.xpose.msra.mxu0 0.0
        %421 = vmatprep.subr.mxu0 0.0
        %422 = vmatpush1.xpose.msra.mxu0 0.0
        %423 = vmatprep.subr.mxu0 0.0
        %424 = vmatpush1.xpose.msra.mxu0 0.0
        %425 = vmatprep.subr.mxu0 0.0
        %426 = vmatpush1.xpose.msra.mxu0 0.0
        %427 = vmatprep.subr.mxu0 0.0
        %428 = vmatpush1.xpose.msra.mxu0 0.0
        %429 = vmatprep.subr.mxu0 0.0
        %430 = vmatpush1.xpose.msra.mxu0 0.0
        %431 = vmatprep.subr.mxu0 0.0
        %432 = vmatpush1.xpose.msra.mxu0 0.0
        %433 = vmatprep.subr.mxu0 0.0
        %434 = vmatpush1.xpose.msra.mxu0 0.0
        %435 = vmatprep.subr.mxu0 0.0
        %436 = vmatpush1.xpose.msra.mxu0 0.0
        %437 = vmatprep.subr.mxu0 0.0
        %438 = vmatpush1.xpose.msra.mxu0 0.0
        %439 = vmatprep.subr.mxu0 0.0
        %440 = vmatpush1.xpose.msra.mxu0 0.0
        %441 = vmatprep.subr.mxu0 0.0
        %442 = vmatpush1.xpose.msra.mxu0 0.0
        %443 = vmatprep.subr.mxu0 0.0
        %444 = vmatpush1.xpose.msra.mxu0 0.0
        %445 = vmatprep.subr.mxu0 0.0
        %446 = vmatpush1.xpose.msra.mxu0 0.0
        %447 = vmatprep.subr.mxu0 0.0
        %448 = vmatpush1.xpose.msra.mxu0 0.0
        %449 = vmatprep.subr.mxu0 0.0
        %450 = vmatpush1.xpose.msra.mxu0 0.0
        %451 = vmatprep.subr.mxu0 0.0
        %452 = vmatpush1.xpose.msra.mxu0 0.0
        %453 = vmatprep.subr.mxu0 0.0
        %454 = vmatpush1.xpose.msra.mxu0 0.0
        %455 = vmatprep.subr.mxu0 0.0
        %456 = vmatpush1.xpose.msra.mxu0 0.0
        %457 = vmatprep.subr.mxu0 0.0
        %458 = vmatpush1.xpose.msra.mxu0 0.0
        %459 = vmatprep.subr.mxu0 0.0
        %460 = vmatpush1.xpose.msra.mxu0 0.0
        %461 = vmatprep.subr.mxu0 0.0
        %462 = vmatpush1.xpose.msra.mxu0 0.0
        %463 = vmatprep.subr.mxu0 0.0
        %464 = vmatpush1.xpose.msra.mxu0 0.0
        %465 = vmatprep.mubr.f32.mxu0 0.0
        %466 = vmatmul.mubr.f32.gmra.mrb[0].mxu0 %v393
        %v467 = vpop.f32.mrb[0].mxu0
        %v468 = vadd.f32 0.0, %v467
        %v469 = vpop.f32.mrb[0].mxu0
        %470 = vmatprep.mubr.f32.mxu0 0.0
        %471 = vmatmul.mubr.f32.gmra.mrb[0].mxu0 %v395
        %v472 = vpop.f32.mrb[0].mxu0
        %v473 = vadd.f32 0.0, %v472
        %v474 = vpop.f32.mrb[0].mxu0
        %475 = vdwg.mxu0
        %vm476 = vcmask 130048
        %v477 = vsel %vm476, %v468, -inf
        %478 = vmax.xlane.f32.xlu0 %v477
        %v479 = vpop.xlane.xlu0 %478
        %v480 = vsel %vm476, %v473, -inf
        %481 = vmax.xlane.f32.xlu0 %v480
        %v482 = vpop.xlane.xlu0 %481
        %v483 = vsub.f32 %v468, %v479
        %v484 = vsub.f32 %v473, %v482
        %v485 = vmul.f32 %v483, 1.442695
        %v486 = vpow.pop %v485
        %v487 = vmul.f32 %v484, 1.442695
        %v488 = vpow.pop %v487
        %v489 = vsel %vm476, %v486, 0.0
        %490 = vadd.xlane.f32.xlu0 %v489
        %v491 = vpop.xlane.xlu0 %490
        %v492 = vsel %vm476, %v488, 0.0
        %493 = vadd.xlane.f32.xlu0 %v492
        %v494 = vpop.xlane.xlu0 %493
        %v496 = vsel %vm476, %v486, 0
        %v499 = vsel %vm476, %v488, 0
        %501 = vmatprep.subr.mxu0 0.0
        %502 = vmatpush1.msra.mxu0 %v378
        %503 = vmatprep.subr.mxu0 0.0
        %504 = vmatpush1.msra.mxu0 %v384
        %505 = vmatprep.subr.mxu0 0.0
        %506 = vmatpush1.msra.mxu0 0.0
        %507 = vmatprep.subr.mxu0 0.0
        %508 = vmatpush1.msra.mxu0 0.0
        %509 = vmatprep.subr.mxu0 0.0
        %510 = vmatpush1.msra.mxu0 0.0
        %511 = vmatprep.subr.mxu0 0.0
        %512 = vmatpush1.msra.mxu0 0.0
        %513 = vmatprep.subr.mxu0 0.0
        %514 = vmatpush1.msra.mxu0 0.0
        %515 = vmatprep.subr.mxu0 0.0
        %516 = vmatpush1.msra.mxu0 0.0
        %517 = vmatprep.subr.mxu0 0.0
        %518 = vmatpush1.msra.mxu0 0.0
        %519 = vmatprep.subr.mxu0 0.0
        %520 = vmatpush1.msra.mxu0 0.0
        %521 = vmatprep.subr.mxu0 0.0
        %522 = vmatpush1.msra.mxu0 0.0
        %523 = vmatprep.subr.mxu0 0.0
        %524 = vmatpush1.msra.mxu0 0.0
        %525 = vmatprep.subr.mxu0 0.0
        %526 = vmatpush1.msra.mxu0 0.0
        %527 = vmatprep.subr.mxu0 0.0
        %528 = vmatpush1.msra.mxu0 0.0
        %529 = vmatprep.subr.mxu0 0.0
        %530 = vmatpush1.msra.mxu0 0.0
        %531 = vmatprep.subr.mxu0 0.0
        %532 = vmatpush1.msra.mxu0 0.0
        %533 = vmatprep.subr.mxu0 0.0
        %534 = vmatpush1.msra.mxu0 0.0
        %535 = vmatprep.subr.mxu0 0.0
        %536 = vmatpush1.msra.mxu0 0.0
        %537 = vmatprep.subr.mxu0 0.0
        %538 = vmatpush1.msra.mxu0 0.0
        %539 = vmatprep.subr.mxu0 0.0
        %540 = vmatpush1.msra.mxu0 0.0
        %541 = vmatprep.subr.mxu0 0.0
        %542 = vmatpush1.msra.mxu0 0.0
        %543 = vmatprep.subr.mxu0 0.0
        %544 = vmatpush1.msra.mxu0 0.0
        %545 = vmatprep.subr.mxu0 0.0
        %546 = vmatpush1.msra.mxu0 0.0
        %547 = vmatprep.subr.mxu0 0.0
        %548 = vmatpush1.msra.mxu0 0.0
        %549 = vmatprep.subr.mxu0 0.0
        %550 = vmatpush1.msra.mxu0 0.0
        %551 = vmatprep.subr.mxu0 0.0
        %552 = vmatpush1.msra.mxu0 0.0
        %553 = vmatprep.subr.mxu0 0.0
        %554 = vmatpush1.msra.mxu0 0.0
        %555 = vmatprep.subr.mxu0 0.0
        %556 = vmatpush1.msra.mxu0 0.0
        %557 = vmatprep.subr.mxu0 0.0
        %558 = vmatpush1.msra.mxu0 0.0
        %559 = vmatprep.subr.mxu0 0.0
        %560 = vmatpush1.msra.mxu0 0.0
        %561 = vmatprep.subr.mxu0 0.0
        %562 = vmatpush1.msra.mxu0 0.0
        %563 = vmatprep.subr.mxu0 0.0
        %564 = vmatpush1.msra.mxu0 0.0
        %565 = vmatprep.mubr.f32.mxu0 0.0
        %566 = vmatmul.mubr.f32.gmra.mrb[0].mxu0 %v496
        %v567 = vpop.f32.mrb[0].mxu0
        %v568 = vadd.f32 0.0, %v567
        %v569 = vpop.f32.mrb[0].mxu0
        %570 = vmatprep.mubr.f32.mxu0 0.0
        %571 = vmatmul.mubr.f32.gmra.mrb[0].mxu0 %v499
        %v572 = vpop.f32.mrb[0].mxu0
        %v573 = vadd.f32 0.0, %v572
        %v574 = vpop.f32.mrb[0].mxu0
        %575 = vdwg.mxu0
        %v576 = vrcp.pop %v491
        %v577 = vrcp.pop %v494
        %v578 = vmul.f32 %v568, %v576
        %v579 = vmul.f32 %v573, %v577
        %580 = vrot.lane.b32.xlu0 %v376, 96
        %v581 = vpop.permute.xlu0 %580
        %582 = vrot.lane.b32.xlu0 %v382, 96
        %v583 = vpop.permute.xlu0 %582
        %584 = vrot.lane.b32.xlu0 %v376, 32
        %v585 = vpop.permute.xlu0 %584
        %586 = vrot.lane.b32.xlu0 %v382, 32
        %v587 = vpop.permute.xlu0 %586
        %v588 = vsel %vm392, %v581, 0
        %v590 = vsel %vm392, %v583, 0
        %v592 = vsel %vm392, %v585, 0
        %v594 = vsel %vm392, %v587, 0
        %596 = vmatprep.subr.mxu0 0.0
        %597 = vmatpush1.xpose.msra.mxu0 %v592
        %598 = vmatprep.subr.mxu0 0.0
        %599 = vmatpush1.xpose.msra.mxu0 %v594
        %600 = vmatprep.subr.mxu0 0.0
        %601 = vmatpush1.xpose.msra.mxu0 0.0
        %602 = vmatprep.subr.mxu0 0.0
        %603 = vmatpush1.xpose.msra.mxu0 0.0
        %604 = vmatprep.subr.mxu0 0.0
        %605 = vmatpush1.xpose.msra.mxu0 0.0
        %606 = vmatprep.subr.mxu0 0.0
        %607 = vmatpush1.xpose.msra.mxu0 0.0
        %608 = vmatprep.subr.mxu0 0.0
        %609 = vmatpush1.xpose.msra.mxu0 0.0
        %610 = vmatprep.subr.mxu0 0.0
        %611 = vmatpush1.xpose.msra.mxu0 0.0
        %612 = vmatprep.subr.mxu0 0.0
        %613 = vmatpush1.xpose.msra.mxu0 0.0
        %614 = vmatprep.subr.mxu0 0.0
        %615 = vmatpush1.xpose.msra.mxu0 0.0
        %616 = vmatprep.subr.mxu0 0.0
        %617 = vmatpush1.xpose.msra.mxu0 0.0
        %618 = vmatprep.subr.mxu0 0.0
        %619 = vmatpush1.xpose.msra.mxu0 0.0
        %620 = vmatprep.subr.mxu0 0.0
        %621 = vmatpush1.xpose.msra.mxu0 0.0
        %622 = vmatprep.subr.mxu0 0.0
        %623 = vmatpush1.xpose.msra.mxu0 0.0
        %624 = vmatprep.subr.mxu0 0.0
        %625 = vmatpush1.xpose.msra.mxu0 0.0
        %626 = vmatprep.subr.mxu0 0.0
        %627 = vmatpush1.xpose.msra.mxu0 0.0
        %628 = vmatprep.subr.mxu0 0.0
        %629 = vmatpush1.xpose.msra.mxu0 0.0
        %630 = vmatprep.subr.mxu0 0.0
        %631 = vmatpush1.xpose.msra.mxu0 0.0
        %632 = vmatprep.subr.mxu0 0.0
        %633 = vmatpush1.xpose.msra.mxu0 0.0
        %634 = vmatprep.subr.mxu0 0.0
        %635 = vmatpush1.xpose.msra.mxu0 0.0
        %636 = vmatprep.subr.mxu0 0.0
        %637 = vmatpush1.xpose.msra.mxu0 0.0
        %638 = vmatprep.subr.mxu0 0.0
        %639 = vmatpush1.xpose.msra.mxu0 0.0
        %640 = vmatprep.subr.mxu0 0.0
        %641 = vmatpush1.xpose.msra.mxu0 0.0
        %642 = vmatprep.subr.mxu0 0.0
        %643 = vmatpush1.xpose.msra.mxu0 0.0
        %644 = vmatprep.subr.mxu0 0.0
        %645 = vmatpush1.xpose.msra.mxu0 0.0
        %646 = vmatprep.subr.mxu0 0.0
        %647 = vmatpush1.xpose.msra.mxu0 0.0
        %648 = vmatprep.subr.mxu0 0.0
        %649 = vmatpush1.xpose.msra.mxu0 0.0
        %650 = vmatprep.subr.mxu0 0.0
        %651 = vmatpush1.xpose.msra.mxu0 0.0
        %652 = vmatprep.subr.mxu0 0.0
        %653 = vmatpush1.xpose.msra.mxu0 0.0
        %654 = vmatprep.subr.mxu0 0.0
        %655 = vmatpush1.xpose.msra.mxu0 0.0
        %656 = vmatprep.subr.mxu0 0.0
        %657 = vmatpush1.xpose.msra.mxu0 0.0
        %658 = vmatprep.subr.mxu0 0.0
        %659 = vmatpush1.xpose.msra.mxu0 0.0
        %660 = vmatprep.mubr.f32.mxu0 0.0
        %661 = vmatmul.mubr.f32.gmra.mrb[0].mxu0 %v588
        %v662 = vpop.f32.mrb[0].mxu0
        %v663 = vadd.f32 0.0, %v662
        %v664 = vpop.f32.mrb[0].mxu0
        %665 = vmatprep.mubr.f32.mxu0 0.0
        %666 = vmatmul.mubr.f32.gmra.mrb[0].mxu0 %v590
        %v667 = vpop.f32.mrb[0].mxu0
        %v668 = vadd.f32 0.0, %v667
        %v669 = vpop.f32.mrb[0].mxu0
        %670 = vdwg.mxu0
        %v671 = vsel %vm476, %v663, -inf
        %672 = vmax.xlane.f32.xlu0 %v671
        %v673 = vpop.xlane.xlu0 %672
        %v674 = vsel %vm476, %v668, -inf
        %675 = vmax.xlane.f32.xlu0 %v674
        %v676 = vpop.xlane.xlu0 %675
        %v677 = vsub.f32 %v663, %v673
        %v678 = vsub.f32 %v668, %v676
        %v679 = vmul.f32 %v677, 1.442695
        %v680 = vpow.pop %v679
        %v681 = vmul.f32 %v678, 1.442695
        %v682 = vpow.pop %v681
        %v683 = vsel %vm476, %v680, 0.0
        %684 = vadd.xlane.f32.xlu0 %v683
        %v685 = vpop.xlane.xlu0 %684
        %v686 = vsel %vm476, %v682, 0.0
        %687 = vadd.xlane.f32.xlu0 %v686
        %v688 = vpop.xlane.xlu0 %687
        %691 = vrot.lane.b32.xlu0 %v378, 96
        %v692 = vpop.permute.xlu0 %691
        %693 = vrot.lane.b32.xlu0 %v384, 96
        %v694 = vpop.permute.xlu0 %693
        %v698 = vsel %vm476, %v680, 0
        %v701 = vsel %vm476, %v682, 0
        %703 = vmatprep.subr.mxu0 0.0
        %704 = vmatpush1.msra.mxu0 %v692
        %705 = vmatprep.subr.mxu0 0.0
        %706 = vmatpush1.msra.mxu0 %v694
        %707 = vmatprep.subr.mxu0 0.0
        %708 = vmatpush1.msra.mxu0 0.0
        %709 = vmatprep.subr.mxu0 0.0
        %710 = vmatpush1.msra.mxu0 0.0
        %711 = vmatprep.subr.mxu0 0.0
        %712 = vmatpush1.msra.mxu0 0.0
        %713 = vmatprep.subr.mxu0 0.0
        %714 = vmatpush1.msra.mxu0 0.0
        %715 = vmatprep.subr.mxu0 0.0
        %716 = vmatpush1.msra.mxu0 0.0
        %717 = vmatprep.subr.mxu0 0.0
        %718 = vmatpush1.msra.mxu0 0.0
        %719 = vmatprep.subr.mxu0 0.0
        %720 = vmatpush1.msra.mxu0 0.0
        %721 = vmatprep.subr.mxu0 0.0
        %722 = vmatpush1.msra.mxu0 0.0
        %723 = vmatprep.subr.mxu0 0.0
        %724 = vmatpush1.msra.mxu0 0.0
        %725 = vmatprep.subr.mxu0 0.0
        %726 = vmatpush1.msra.mxu0 0.0
        %727 = vmatprep.subr.mxu0 0.0
        %728 = vmatpush1.msra.mxu0 0.0
        %729 = vmatprep.subr.mxu0 0.0
        %730 = vmatpush1.msra.mxu0 0.0
        %731 = vmatprep.subr.mxu0 0.0
        %732 = vmatpush1.msra.mxu0 0.0
        %733 = vmatprep.subr.mxu0 0.0
        %734 = vmatpush1.msra.mxu0 0.0
        %735 = vmatprep.subr.mxu0 0.0
        %736 = vmatpush1.msra.mxu0 0.0
        %737 = vmatprep.subr.mxu0 0.0
        %738 = vmatpush1.msra.mxu0 0.0
        %739 = vmatprep.subr.mxu0 0.0
        %740 = vmatpush1.msra.mxu0 0.0
        %741 = vmatprep.subr.mxu0 0.0
        %742 = vmatpush1.msra.mxu0 0.0
        %743 = vmatprep.subr.mxu0 0.0
        %744 = vmatpush1.msra.mxu0 0.0
        %745 = vmatprep.subr.mxu0 0.0
        %746 = vmatpush1.msra.mxu0 0.0
        %747 = vmatprep.subr.mxu0 0.0
        %748 = vmatpush1.msra.mxu0 0.0
        %749 = vmatprep.subr.mxu0 0.0
        %750 = vmatpush1.msra.mxu0 0.0
        %751 = vmatprep.subr.mxu0 0.0
        %752 = vmatpush1.msra.mxu0 0.0
        %753 = vmatprep.subr.mxu0 0.0
        %754 = vmatpush1.msra.mxu0 0.0
        %755 = vmatprep.subr.mxu0 0.0
        %756 = vmatpush1.msra.mxu0 0.0
        %757 = vmatprep.subr.mxu0 0.0
        %758 = vmatpush1.msra.mxu0 0.0
        %759 = vmatprep.subr.mxu0 0.0
        %760 = vmatpush1.msra.mxu0 0.0
        %761 = vmatprep.subr.mxu0 0.0
        %762 = vmatpush1.msra.mxu0 0.0
        %763 = vmatprep.subr.mxu0 0.0
        %764 = vmatpush1.msra.mxu0 0.0
        %765 = vmatprep.subr.mxu0 0.0
        %766 = vmatpush1.msra.mxu0 0.0
        %767 = vmatprep.mubr.f32.mxu0 0.0
        %768 = vmatmul.mubr.f32.gmra.mrb[0].mxu0 %v698
        %v769 = vpop.f32.mrb[0].mxu0
        %v770 = vadd.f32 0.0, %v769
        %v771 = vpop.f32.mrb[0].mxu0
        %772 = vmatprep.mubr.f32.mxu0 0.0
        %773 = vmatmul.mubr.f32.gmra.mrb[0].mxu0 %v701
        %v774 = vpop.f32.mrb[0].mxu0
        %v775 = vadd.f32 0.0, %v774
        %v776 = vpop.f32.mrb[0].mxu0
        %777 = vdwg.mxu0
        %v778 = vrcp.pop %v685
        %v779 = vrcp.pop %v688
        %v780 = vmul.f32 %v770, %v778
        %v781 = vmul.f32 %v775, %v779
        %784 = vrot.lane.b32.xlu0 %v780, 32
        %v785 = vpop.permute.xlu0 %784
        %786 = vrot.lane.b32.xlu0 %v781, 32
        %v787 = vpop.permute.xlu0 %786
        %v790 = vsel %vm392, %v578, %v785
        %v791 = vsel %vm392, %v579, %v787
        %v792 = vld [vmem:[#allocation7] sm:$0xff]
        %v793 = vld [vmem:[#allocation7 + $0x8] sm:$0xff]
        %v794 = vld [vmem:[#allocation7 + $0x10] sm:$0xff]
        %v795 = vld [vmem:[#allocation7 + $0x18] sm:$0xff]
        %v796 = vld [vmem:[#allocation7 + $0x20] sm:$0xff]
        %v797 = vld [vmem:[#allocation7 + $0x28] sm:$0xff]
        %v798 = vld [vmem:[#allocation7 + $0x30] sm:$0xff]
        %v799 = vld [vmem:[#allocation7 + $0x38] sm:$0xff]
        %v800 = vld [vmem:[%s4] sm:$0x1]
        %v802 = vlaneseq
        %v803 = vshrl.u32 %v802, 7
        %v804 = vsub.s32 0, %v803
        %v805 = vrot.slane %v800, %v804
        %v808 = vsel %vm302, %v790, 0
        %v811 = vsel %vm302, %v791, 0
        %813 = vmatprep.subr.mxu0 0.0
        %814 = vmatpush1.msra.mxu0 %v792
        %815 = vmatprep.subr.mxu0 0.0
        %816 = vmatpush1.msra.mxu0 %v793
        %817 = vmatprep.subr.mxu0 0.0
        %818 = vmatpush1.msra.mxu0 %v794
        %819 = vmatprep.subr.mxu0 0.0
        %820 = vmatpush1.msra.mxu0 %v795
        %821 = vmatprep.subr.mxu0 0.0
        %822 = vmatpush1.msra.mxu0 %v796
        %823 = vmatprep.subr.mxu0 0.0
        %824 = vmatpush1.msra.mxu0 %v797
        %825 = vmatprep.subr.mxu0 0.0
        %826 = vmatpush1.msra.mxu0 %v798
        %827 = vmatprep.subr.mxu0 0.0
        %828 = vmatpush1.msra.mxu0 %v799
        %829 = vmatprep.subr.mxu0 0.0
        %830 = vmatpush1.msra.mxu0 0.0
        %831 = vmatprep.subr.mxu0 0.0
        %832 = vmatpush1.msra.mxu0 0.0
        %833 = vmatprep.subr.mxu0 0.0
        %834 = vmatpush1.msra.mxu0 0.0
        %835 = vmatprep.subr.mxu0 0.0
        %836 = vmatpush1.msra.mxu0 0.0
        %837 = vmatprep.subr.mxu0 0.0
        %838 = vmatpush1.msra.mxu0 0.0
        %839 = vmatprep.subr.mxu0 0.0
        %840 = vmatpush1.msra.mxu0 0.0
        %841 = vmatprep.subr.mxu0 0.0
        %842 = vmatpush1.msra.mxu0 0.0
        %843 = vmatprep.subr.mxu0 0.0
        %844 = vmatpush1.msra.mxu0 0.0
        %845 = vmatprep.subr.mxu0 0.0
        %846 = vmatpush1.msra.mxu0 0.0
        %847 = vmatprep.subr.mxu0 0.0
        %848 = vmatpush1.msra.mxu0 0.0
        %849 = vmatprep.subr.mxu0 0.0
        %850 = vmatpush1.msra.mxu0 0.0
        %851 = vmatprep.subr.mxu0 0.0
        %852 = vmatpush1.msra.mxu0 0.0
        %853 = vmatprep.subr.mxu0 0.0
        %854 = vmatpush1.msra.mxu0 0.0
        %855 = vmatprep.subr.mxu0 0.0
        %856 = vmatpush1.msra.mxu0 0.0
        %857 = vmatprep.subr.mxu0 0.0
        %858 = vmatpush1.msra.mxu0 0.0
        %859 = vmatprep.subr.mxu0 0.0
        %860 = vmatpush1.msra.mxu0 0.0
        %861 = vmatprep.subr.mxu0 0.0
        %862 = vmatpush1.msra.mxu0 0.0
        %863 = vmatprep.subr.mxu0 0.0
        %864 = vmatpush1.msra.mxu0 0.0
        %865 = vmatprep.subr.mxu0 0.0
        %866 = vmatpush1.msra.mxu0 0.0
        %867 = vmatprep.subr.mxu0 0.0
        %868 = vmatpush1.msra.mxu0 0.0
        %869 = vmatprep.subr.mxu0 0.0
        %870 = vmatpush1.msra.mxu0 0.0
        %871 = vmatprep.subr.mxu0 0.0
        %872 = vmatpush1.msra.mxu0 0.0
        %873 = vmatprep.subr.mxu0 0.0
        %874 = vmatpush1.msra.mxu0 0.0
        %875 = vmatprep.subr.mxu0 0.0
        %876 = vmatpush1.msra.mxu0 0.0
        %877 = vmatprep.mubr.f32.mxu0 0.0
        %878 = vmatmul.mubr.f32.gmra.mrb[0].mxu0 %v808
        %v879 = vpop.f32.mrb[0].mxu0
        %v880 = vadd.f32 %v805, %v879
        %v881 = vpop.f32.mrb[0].mxu0
        %882 = vmatprep.mubr.f32.mxu0 0.0
        %883 = vmatmul.mubr.f32.gmra.mrb[0].mxu0 %v811
        %v884 = vpop.f32.mrb[0].mxu0
        %v885 = vadd.f32 %v805, %v884
        %v886 = vpop.f32.mrb[0].mxu0
        %887 = vdwg.mxu0
        %888 = vst.msk [vmem:[%s271] sm:$0xff] %vm302, %v880
        %889 = vst.msk [vmem:[%s271 + $0x8] sm:$0xff] %vm302, %v885
        %s890 = sand.u32 %s141, 1
        %s891 = scalar_lea.sflag [#allocation4], %s890
        %s892 = sand.u32 %s141, 1
        %s893 = smul.addr %s892, 16
        %s894 = scalar_lea.vmem [#allocation8], %s893
        // Predicated region
        $region53: #{mhsa_cl_forward.1} parent=39 // pred_check
          %p895 = pneg %p151
        $region54: #{mhsa_cl_forward.1} parent=39 // pred_check_branch
          %897 = sbr.rel (%p895) target = $region56
        $region55: #{mhsa_cl_forward.1} parent=39 // pred_region
          %s899 = ssub.s32 256, 256
          %900 = vsyncadd %s891, %s899
          %s901 = smul.addr %s23, 2
          %s902 = smul.addr %s901, 128
          %s903 = scalar_lea.hbm %s5, %s902
          %s904 = sshll.u32 %s894, 4
          %s905 = int_to_ptr.vmem [resolvable:$true] %s904
          %910 = dma.vmem_to_hbm [thread:$0]  %s905, 256, %s903, %s891, 128, 128, 8
        $region56: #{mhsa_cl_forward.1} parent=39 // pred_fallthru
          _
      $region40: #{mhsa_cl_forward.1} parent=5 // pred_fallthru
        _
      %p911 = scmp.le.s32.totalorder 2, %s18
      // Predicated region
      $region57: #{mhsa_cl_forward.1} parent=5 // pred_check
        %p912 = pneg %p911
      $region58: #{mhsa_cl_forward.1} parent=5 // pred_check_branch
        %914 = sbr.rel (%p912) target = $region60
      $region59: #{mhsa_cl_forward.1} parent=5 // pred_region
        %s915 = ssub.s32 %s18, 2
        // Predicated region
        $region61: #{mhsa_cl_forward.1} parent=59 // pred_check
          %p916 = pneg %p157
        $region62: #{mhsa_cl_forward.1} parent=59 // pred_check_branch
          %918 = sbr.rel (%p916) target = $region64
        $region63: #{mhsa_cl_forward.1} parent=59 // pred_region
          %s919 = sand.u32 %s142, 1
          %s920 = scalar_lea.sflag [#allocation4], %s919
          %s921 = sand.u32 %s142, 1
          %s922 = smul.addr %s921, 16
          %s923 = scalar_lea.vmem [#allocation8], %s922
          %924 = dma.done %s920, 256
        $region64: #{mhsa_cl_forward.1} parent=59 // pred_fallthru
          _
      $region60: #{mhsa_cl_forward.1} parent=5 // pred_fallthru
        _
    $region6: #{mhsa_cl_forward.1} parent=1 // loop_footer
      %s22 = sadd.s32 1, %s18
    $region7: #{mhsa_cl_forward.1} parent=1 // loop_footer_branch
      %17 = sbr.rel target = $region3
    $region8: #{mhsa_cl_forward.1} parent=1 // loop_exit
      _
    %925 = vsyncpa [#allocation3], 1
    %s926 = scalar_lea.sflag [#allocation3], 1
    %927 = vsyncpa %s926, 1
    %928 = vsyncpa [#allocation6], 1
    %929 = vsyncpa [#allocation4], 1
    %s930 = scalar_lea.sflag [#allocation4], 1
    %931 = vsyncpa %s930, 1

</llo_original>
